<compile_context>
chip_gen: v7x
topology: tpu7x:2x2x1
jax: 0.10.0
libtpu: 0.0.40
codegen_flags: <defaults>
</compile_context>

<pallas_src>
import jax
import jax.numpy as jnp
from jax import lax
from jax.experimental import pallas as pl
from jax.experimental.pallas import tpu as pltpu


# ----------------------------------------------------------------------------
# Small path: whole problem resident in VMEM, single kernel invocation.
# ----------------------------------------------------------------------------
def _npairs_ce_small_kernel(desc_ref, code_ref, out_ref):
    # desc_ref, code_ref: [B, H] in VMEM (native dtype); out_ref: [1, 1] in SMEM.
    desc = desc_ref[...]
    code = code_ref[...]

    # scores[a, c] = sum_h desc[a, h] * code[c, h]  (q @ k^T form; Mosaic feeds
    # the MXU directly from this contraction, f32 accumulation).
    scores = lax.dot_general(
        desc, code,
        dimension_numbers=(((1,), (1,)), ((), ())),
        preferred_element_type=jnp.float32,
    ) * 20.0

    # Row-wise logsumexp in f32 (v5e has no bf16 VPU/EUP path).
    m = jnp.max(scores, axis=-1, keepdims=True)                       # [B, 1]
    lse = m + jnp.log(jnp.sum(jnp.exp(scores - m), axis=-1, keepdims=True))

    # Diagonal straight from the inputs: one VPU multiply + one lane reduce,
    # no iota/compare/select over the [B, B] tile.
    diag = 20.0 * jnp.sum(
        desc.astype(jnp.float32) * code.astype(jnp.float32),
        axis=-1, keepdims=True)                                        # [B, 1]

    out_ref[0, 0] = jnp.mean(lse - diag)  # CrossEntropyLoss reduction='mean'


def _npairs_ce_small(desc_repr, code_repr):
    out = pl.pallas_call(
        _npairs_ce_small_kernel,
        out_shape=jax.ShapeDtypeStruct((1, 1), jnp.float32),
        # No grid: single invocation, whole arrays in VMEM, no pipeline
        # prologue/epilogue or double-buffer allocation.
        in_specs=[
            pl.BlockSpec(memory_space=pltpu.VMEM),
            pl.BlockSpec(memory_space=pltpu.VMEM),
        ],
        out_specs=pl.BlockSpec(memory_space=pltpu.SMEM),
    )(desc_repr, code_repr)
    return out[0, 0]


# ----------------------------------------------------------------------------
# Tiled path: online logsumexp over column tiles, row tiles parallel.
# ----------------------------------------------------------------------------
def _npairs_ce_tiled_kernel(desc_ref, code_ref, loss_ref, m_ref, l_ref, diag_ref):
    # desc_ref: [TM, H] row tile, code_ref: [TN, H] column tile (TM == TN).
    # loss_ref: [TM, 1] per-row loss output (resident across the column axis).
    i = pl.program_id(0)          # row-tile index  ("parallel")
    j = pl.program_id(1)          # column-tile index ("arbitrary", reduction)

    @pl.when(j == 0)
    def _():
        m_ref[...] = jnp.full_like(m_ref, -jnp.inf)
        l_ref[...] = jnp.zeros_like(l_ref)

    desc = desc_ref[...]
    code = code_ref[...]

    # Native-dtype operands straight to the MXU, f32 accumulation.
    s = lax.dot_general(
        desc, code,
        dimension_numbers=(((1,), (1,)), ((), ())),
        preferred_element_type=jnp.float32,
    ) * 20.0                                                           # [TM, TN]

    # Online (flash-style) logsumexp update, all in f32.
    m_prev = m_ref[...]
    m_new = jnp.maximum(m_prev, jnp.max(s, axis=-1, keepdims=True))
    alpha = jnp.exp(m_prev - m_new)
    l_ref[...] = alpha * l_ref[...] + jnp.sum(jnp.exp(s - m_new),
                                              axis=-1, keepdims=True)
    m_ref[...] = m_new

    # The diagonal of this row tile lives in column tile j == i; compute it
    # from the inputs (VPU mul + lane reduce) — no special-casing of the
    # scores tile needed.
    @pl.when(j == i)
    def _():
        diag_ref[...] = 20.0 * jnp.sum(
            desc.astype(jnp.float32) * code.astype(jnp.float32),
            axis=-1, keepdims=True)

    @pl.when(j == pl.num_programs(1) - 1)
    def _():
        loss_ref[...] = m_ref[...] + jnp.log(l_ref[...]) - diag_ref[...]


def _npairs_ce_tiled(desc_repr, code_repr, *, tile=128):
    B, H = desc_repr.shape
    assert B % tile == 0, "tiled path requires tile | batch"
    grid = (B // tile, B // tile)

    per_row = pl.pallas_call(
        _npairs_ce_tiled_kernel,
        out_shape=jax.ShapeDtypeStruct((B, 1), jnp.float32),
        grid_spec=pltpu.PrefetchScalarGridSpec(
            num_scalar_prefetch=0,
            grid=grid,
            in_specs=[
                pl.BlockSpec((tile, H), lambda i, j: (i, 0)),   # desc row tile
                pl.BlockSpec((tile, H), lambda i, j: (j, 0)),   # code col tile
            ],
            out_specs=pl.BlockSpec((tile, 1), lambda i, j: (i, 0)),
            scratch_shapes=[
                pltpu.VMEM((tile, 1), jnp.float32),   # running max m
                pltpu.VMEM((tile, 1), jnp.float32),   # running sum l
                pltpu.VMEM((tile, 1), jnp.float32),   # diagonal scores
            ],
        ),
        compiler_params=pltpu.CompilerParams(
            dimension_semantics=("parallel", "arbitrary"),
        ),
    )(desc_repr, code_repr)
    return jnp.mean(per_row[:, 0])


# ----------------------------------------------------------------------------
# Public wrapper: dispatch on size.
# ----------------------------------------------------------------------------
def npairs_cross_entropy_loss(desc_repr, code_repr, *, tile=128):
    """Pallas equivalent of the PyTorch CrossEntropyLoss (N-pairs) forward."""
    B, H = desc_repr.shape
    assert code_repr.shape == (B, H)
    if B > tile and B % tile == 0:
        return _npairs_ce_tiled(desc_repr, code_repr, tile=tile)
    return _npairs_ce_small(desc_repr, code_repr)


# ----------------------------------------------------------------------------
# Pure-JAX reference of the PyTorch forward, for sanity checking.
# ----------------------------------------------------------------------------
def _reference_loss(desc_repr, code_repr):
    d = desc_repr.astype(jnp.float32)
    c = code_repr.astype(jnp.float32)
    scores = jnp.einsum("ab,cb->ac", d, c) * 20.0
    logp = jax.nn.log_softmax(scores, axis=-1)
    tgt = jnp.arange(scores.shape[0])
    return -jnp.mean(logp[tgt, tgt])


if __name__ == "__main__":
    key = jax.random.PRNGKey(0)
    k1, k2, k3, k4 = jax.random.split(key, 4)

    # 1) Small shapes implied by the module (single VMEM block, grid-less).
    batch, hidden = 8, 32
    desc = jax.random.normal(k1, (batch, hidden), dtype=jnp.float32)
    code = jax.random.normal(k2, (batch, hidden), dtype=jnp.float32)
    loss = jax.block_until_ready(npairs_cross_entropy_loss(desc, code))
    ref = _reference_loss(desc, code)
    assert jnp.allclose(loss, ref, rtol=1e-4, atol=1e-4), (loss, ref)

    # 2) Tiled online-logsumexp path, bf16 operands fed straight to the MXU
    #    (2x2 grid of 128-row/col tiles; still a tiny problem, just exercises
    #    the production structure).
    B2, H2 = 256, 128
    desc2 = jax.random.normal(k3, (B2, H2), dtype=jnp.float32).astype(jnp.bfloat16)
    code2 = jax.random.normal(k4, (B2, H2), dtype=jnp.float32).astype(jnp.bfloat16)
    loss2 = jax.block_until_ready(npairs_cross_entropy_loss(desc2, code2))
    ref2 = _reference_loss(desc2, code2)
    assert jnp.allclose(loss2, ref2, rtol=5e-3, atol=5e-2), (loss2, ref2)

    print("KERNEL_OK")
</pallas_src>

<mosaic_0001>
module attributes {stable_mosaic.version = 11 : i64} {
  func.func @_npairs_ce_small_kernel(%arg0: memref<8x32xf32, #tpu.memory_space<vmem>>, %arg1: memref<8x32xf32, #tpu.memory_space<vmem>>, %arg2: memref<1x1xf32, #tpu.memory_space<smem>>) attributes {dimension_semantics = [], scalar_prefetch = 0 : i64, scratch_operands = 0 : i64, tpu.core_type = #tpu.core_type<tc>} {
    %c0 = arith.constant 0 : index
    %c0_0 = arith.constant 0 : index
    %0 = vector.load %arg0[%c0, %c0_0] : memref<8x32xf32, #tpu.memory_space<vmem>>, vector<8x32xf32>
    %c0_1 = arith.constant 0 : index
    %c0_2 = arith.constant 0 : index
    %1 = vector.load %arg1[%c0_1, %c0_2] : memref<8x32xf32, #tpu.memory_space<vmem>>, vector<8x32xf32>
    %cst = arith.constant dense<0.000000e+00> : vector<8x8xf32>
    %2 = tpu.matmul %0, %1, %cst {dimension_numbers = #tpu.dot_dimension_numbers<[1], [1], [0], [0], [0, 0, 1, 0], [], []>} : vector<8x32xf32>, vector<8x32xf32>, vector<8x8xf32> -> vector<8x8xf32>
    %cst_3 = arith.constant 2.000000e+01 : f32
    %3 = vector.broadcast %cst_3 : f32 to vector<8x8xf32>
    %4 = arith.mulf %2, %3 : vector<8x8xf32>
    %cst_4 = arith.constant dense<0xFF800000> : vector<8xf32>
    %5 = vector.multi_reduction <maximumf>, %4, %cst_4 [1] : vector<8x8xf32> to vector<8xf32>
    %6 = vector.shape_cast %5 : vector<8xf32> to vector<8x1xf32>
    %7 = vector.broadcast %6 : vector<8x1xf32> to vector<8x8xf32>
    %8 = arith.subf %4, %7 : vector<8x8xf32>
    %9 = math.exp %8 : vector<8x8xf32>
    %cst_5 = arith.constant dense<0.000000e+00> : vector<8xf32>
    %10 = vector.multi_reduction <add>, %9, %cst_5 [1] : vector<8x8xf32> to vector<8xf32>
    %11 = vector.shape_cast %10 : vector<8xf32> to vector<8x1xf32>
    %12 = math.log %11 : vector<8x1xf32>
    %13 = arith.addf %6, %12 : vector<8x1xf32>
    %14 = arith.mulf %0, %1 : vector<8x32xf32>
    %cst_6 = arith.constant dense<0.000000e+00> : vector<8xf32>
    %15 = vector.multi_reduction <add>, %14, %cst_6 [1] : vector<8x32xf32> to vector<8xf32>
    %16 = vector.shape_cast %15 : vector<8xf32> to vector<8x1xf32>
    %cst_7 = arith.constant 2.000000e+01 : f32
    %17 = vector.broadcast %cst_7 : f32 to vector<8x1xf32>
    %18 = arith.mulf %17, %16 : vector<8x1xf32>
    %19 = arith.subf %13, %18 : vector<8x1xf32>
    %20 = vector.shape_cast %19 : vector<8x1xf32> to vector<1x8x1xf32>
    %cst_8 = arith.constant dense<0.000000e+00> : vector<1xf32>
    %21 = vector.multi_reduction <add>, %20, %cst_8 [1, 2] : vector<1x8x1xf32> to vector<1xf32>
    %22 = vector.shape_cast %21 : vector<1xf32> to vector<1x1x1xf32>
    %23 = vector.extract %22[0, 0, 0] : f32 from vector<1x1x1xf32>
    %cst_9 = arith.constant 8.000000e+00 : f32
    %24 = arith.divf %23, %cst_9 : f32
    %c0_10 = arith.constant 0 : index
    %c0_11 = arith.constant 0 : index
    %25 = memref.load %arg2[%c0_10, %c0_11] : memref<1x1xf32, #tpu.memory_space<smem>>
    memref.store %24, %arg2[%c0_10, %c0_11] : memref<1x1xf32, #tpu.memory_space<smem>>
    return
  }
}

</mosaic_0001>

<llo_original>
// kernel: tpu_custom_call.1
$region0: #{tpu_custom_call.1}
  #allocation0 [shape = 'u32[]', space=smem, size = 0x4, offset = 0x4, fixed_abs, tag = 'smem constant byte address 0x4 - core index']
  #allocation1 [shape = 'u32[144,128]{1,0:T(1,128)}', space=vmem, size = 0x12000, scoped, tag = 'internal scratch']
  %s0 = inlined_call_operand.hbm [shape: f32[8,32], index: 0, kind: input, shape index: {}]
  %s1 = inlined_call_operand.hbm [shape: f32[8,32], index: 1, kind: input, shape index: {}]
  %s2 = inlined_call_operand.hbm [shape: f32[1,1], index: 2, kind: output, shape index: {}]
  %s3 = sld [smem:[#allocation0]]
  $region26: #{tpu_custom_call.1} parent=0
    _
  %s5 = ssub.s32 1, %s3
  %s6 = scalar_select 0, %s5, %s3
  $region1: #{tpu_custom_call.1} parent=0
    #allocation2 [shape = 'u8[4096]{0}', space=vmem, size = 0x1000, scoped, tag = 'input window, operand 0, single buffered']
    #allocation3 [shape = 's32[1]{0}', space=sflag, size = 0x4, scoped, tag = 'scoped memory for tpu_custom_call.1']
    #allocation4 [shape = 's32[1]{0}', space=sflag, size = 0x4, scoped, tag = 'scoped memory for tpu_custom_call.1']
    #allocation5 [shape = 'u8[4096]{0}', space=vmem, size = 0x1000, scoped, tag = 'input window, operand 1, single buffered']
    #allocation6 [shape = 's32[1]{0}', space=sflag, size = 0x4, scoped, tag = 'scoped memory for tpu_custom_call.1']
    #allocation7 [shape = 'u8[512]{0}', space=smem, size = 0x200, scoped, tag = 'output window, operand 0, single buffered']
    %7 = vsyncpa [#allocation3], 0
    %8 = vsyncpa [#allocation6], 0
    %9 = vsyncpa [#allocation4], 0
    // Predicated region
    $region2: #{tpu_custom_call.1} parent=1 // pred_check
      _
    $region3: #{tpu_custom_call.1} parent=1 // pred_check_branch
      %11 = sbr.rel (0) target = $region5
    $region4: #{tpu_custom_call.1} parent=1 // pred_region
      %s13 = ssub.s32 128, 128
      %14 = vsyncadd [#allocation3], %s13
      %s16 = sshll.u32 [#allocation2], 4
      %s17 = int_to_ptr.vmem [resolvable:$true] %s16
      %19 = dma.hbm_to_vmem [thread:$0]  %s0, 128, %s17, [#allocation3]
    $region5: #{tpu_custom_call.1} parent=1 // pred_fallthru
      _
    // Predicated region
    $region6: #{tpu_custom_call.1} parent=1 // pred_check
      _
    $region7: #{tpu_custom_call.1} parent=1 // pred_check_branch
      %21 = sbr.rel (0) target = $region9
    $region8: #{tpu_custom_call.1} parent=1 // pred_region
      %s23 = ssub.s32 128, 128
      %24 = vsyncadd [#allocation6], %s23
      %s26 = sshll.u32 [#allocation5], 4
      %s27 = int_to_ptr.vmem [resolvable:$true] %s26
      %29 = dma.hbm_to_vmem [thread:$0]  %s1, 128, %s27, [#allocation6]
    $region9: #{tpu_custom_call.1} parent=1 // pred_fallthru
      _
    // Predicated region
    $region10: #{tpu_custom_call.1} parent=1 // pred_check
      _
    $region11: #{tpu_custom_call.1} parent=1 // pred_check_branch
      %31 = sbr.rel (0) target = $region13
    $region12: #{tpu_custom_call.1} parent=1 // pred_region
      %32 = dma.done [#allocation3], 128
    $region13: #{tpu_custom_call.1} parent=1 // pred_fallthru
      _
    // Predicated region
    $region14: #{tpu_custom_call.1} parent=1 // pred_check
      _
    $region15: #{tpu_custom_call.1} parent=1 // pred_check_branch
      %34 = sbr.rel (0) target = $region17
    $region16: #{tpu_custom_call.1} parent=1 // pred_region
      %35 = dma.done [#allocation6], 128
    $region17: #{tpu_custom_call.1} parent=1 // pred_fallthru
      _
    %v36 = vld [vmem:[#allocation2] sm:$0xff]
    %v37 = vld [vmem:[#allocation5] sm:$0xff]
    %vm38 = vcmask 261120
    %v40 = vsel %vm38, %v36, 0
    %v43 = vsel %vm38, %v37, 0
    %45 = vmatprep.subr.mxu0 0.0
    %46 = vmatpush1.xpose.msra.mxu0 %v43
    %47 = vmatprep.subr.mxu0 0.0
    %48 = vmatpush1.xpose.msra.mxu0 0.0
    %49 = vmatprep.subr.mxu0 0.0
    %50 = vmatpush1.xpose.msra.mxu0 0.0
    %51 = vmatprep.subr.mxu0 0.0
    %52 = vmatpush1.xpose.msra.mxu0 0.0
    %53 = vmatprep.subr.mxu0 0.0
    %54 = vmatpush1.xpose.msra.mxu0 0.0
    %55 = vmatprep.subr.mxu0 0.0
    %56 = vmatpush1.xpose.msra.mxu0 0.0
    %57 = vmatprep.subr.mxu0 0.0
    %58 = vmatpush1.xpose.msra.mxu0 0.0
    %59 = vmatprep.subr.mxu0 0.0
    %60 = vmatpush1.xpose.msra.mxu0 0.0
    %61 = vmatprep.subr.mxu0 0.0
    %62 = vmatpush1.xpose.msra.mxu0 0.0
    %63 = vmatprep.subr.mxu0 0.0
    %64 = vmatpush1.xpose.msra.mxu0 0.0
    %65 = vmatprep.subr.mxu0 0.0
    %66 = vmatpush1.xpose.msra.mxu0 0.0
    %67 = vmatprep.subr.mxu0 0.0
    %68 = vmatpush1.xpose.msra.mxu0 0.0
    %69 = vmatprep.subr.mxu0 0.0
    %70 = vmatpush1.xpose.msra.mxu0 0.0
    %71 = vmatprep.subr.mxu0 0.0
    %72 = vmatpush1.xpose.msra.mxu0 0.0
    %73 = vmatprep.subr.mxu0 0.0
    %74 = vmatpush1.xpose.msra.mxu0 0.0
    %75 = vmatprep.subr.mxu0 0.0
    %76 = vmatpush1.xpose.msra.mxu0 0.0
    %77 = vmatprep.subr.mxu0 0.0
    %78 = vmatpush1.xpose.msra.mxu0 0.0
    %79 = vmatprep.subr.mxu0 0.0
    %80 = vmatpush1.xpose.msra.mxu0 0.0
    %81 = vmatprep.subr.mxu0 0.0
    %82 = vmatpush1.xpose.msra.mxu0 0.0
    %83 = vmatprep.subr.mxu0 0.0
    %84 = vmatpush1.xpose.msra.mxu0 0.0
    %85 = vmatprep.subr.mxu0 0.0
    %86 = vmatpush1.xpose.msra.mxu0 0.0
    %87 = vmatprep.subr.mxu0 0.0
    %88 = vmatpush1.xpose.msra.mxu0 0.0
    %89 = vmatprep.subr.mxu0 0.0
    %90 = vmatpush1.xpose.msra.mxu0 0.0
    %91 = vmatprep.subr.mxu0 0.0
    %92 = vmatpush1.xpose.msra.mxu0 0.0
    %93 = vmatprep.subr.mxu0 0.0
    %94 = vmatpush1.xpose.msra.mxu0 0.0
    %95 = vmatprep.subr.mxu0 0.0
    %96 = vmatpush1.xpose.msra.mxu0 0.0
    %97 = vmatprep.subr.mxu0 0.0
    %98 = vmatpush1.xpose.msra.mxu0 0.0
    %99 = vmatprep.subr.mxu0 0.0
    %100 = vmatpush1.xpose.msra.mxu0 0.0
    %101 = vmatprep.subr.mxu0 0.0
    %102 = vmatpush1.xpose.msra.mxu0 0.0
    %103 = vmatprep.subr.mxu0 0.0
    %104 = vmatpush1.xpose.msra.mxu0 0.0
    %105 = vmatprep.subr.mxu0 0.0
    %106 = vmatpush1.xpose.msra.mxu0 0.0
    %107 = vmatprep.subr.mxu0 0.0
    %108 = vmatpush1.xpose.msra.mxu0 0.0
    %109 = vmatprep.mubr.f32.mxu0 0.0
    %110 = vmatmul.mubr.f32.gmra.mrb[0].mxu0 %v40
    %v111 = vpop.f32.mrb[0].mxu0
    %v112 = vadd.f32 0.0, %v111
    %v113 = vpop.f32.mrb[0].mxu0
    %114 = vdwg.mxu0
    %v115 = vmul.f32 %v112, 20.0
    %vm116 = vcmask 64512
    %v117 = vsel %vm116, %v115, -inf
    %118 = vmax.xlane.f32.xlu0 %v117
    %v119 = vpop.xlane.xlu0 %118
    %v120 = vsub.f32 %v115, %v119
    %v121 = vmul.f32 %v120, 1.442695
    %v122 = vpow.pop %v121
    %v123 = vsel %vm116, %v122, 0.0
    %124 = vadd.xlane.f32.xlu0 %v123
    %v125 = vpop.xlane.xlu0 %124
    %v126 = vlog2.pop %v125
    %v127 = vmul.f32 %v126, 0.6931472
    %v128 = vadd.f32 %v119, %v127
    %v129 = vmul.f32 %v36, %v37
    %v130 = vsel %vm38, %v129, 0.0
    %131 = vadd.xlane.f32.xlu0 %v130
    %v132 = vpop.xlane.xlu0 %131
    %v133 = vmul.f32 %v132, 20.0
    %v134 = vsub.f32 %v128, %v133
    %vm135 = vcmask 7168
    %v136 = vsel %vm135, %v134, 0.0
    %137 = vadd.xlane.f32.xlu0 %v136
    %v138 = vpop.xlane.xlu0 %137
    %v139 = vrot.slane %v138, 4
    %v140 = vadd.f32 %v138, %v139
    %v141 = vrot.slane %v140, 2
    %v142 = vadd.f32 %v140, %v141
    %v143 = vrot.slane %v142, 1
    %v144 = vadd.f32 %v142, %v143
    %s145 = vtos %v144
    %v146 = vrcp.pop 8.0
    %s147 = vtos %v146
    %s148 = smul.f32 %s145, %s147
    %s149 = scalar_lea.smem [#allocation7], 0
    %150 = sst [smem:[%s149]] %s148
    // Predicated region
    $region18: #{tpu_custom_call.1} parent=1 // pred_check
      _
    $region19: #{tpu_custom_call.1} parent=1 // pred_check_branch
      %152 = sbr.rel (0) target = $region21
    $region20: #{tpu_custom_call.1} parent=1 // pred_region
      %s154 = ssub.s32 16, 16
      %155 = vsyncadd [#allocation4], %s154
      %158 = dma.smem_to_hbm [#allocation7], 16, %s2, [#allocation4]
    $region21: #{tpu_custom_call.1} parent=1 // pred_fallthru
      _
    // Predicated region
    $region22: #{tpu_custom_call.1} parent=1 // pred_check
      _
    $region23: #{tpu_custom_call.1} parent=1 // pred_check_branch
      %160 = sbr.rel (0) target = $region25
    $region24: #{tpu_custom_call.1} parent=1 // pred_region
      %161 = dma.done [#allocation4], 16
    $region25: #{tpu_custom_call.1} parent=1 // pred_fallthru
      _
    %162 = sfence
    %163 = vsyncpa [#allocation3], 1
    %164 = vsyncpa [#allocation6], 1
    %165 = vsyncpa [#allocation4], 1

</llo_original>
